<compile_context>
chip_gen: v7x
topology: tpu7x:2x2x1
jax: 0.10.0
libtpu: 0.0.40
codegen_flags: <defaults>
</compile_context>

<pallas_src>
import jax
import jax.numpy as jnp
from jax.experimental import pallas as pl
from jax.experimental.pallas import tpu as pltpu

_LANE = 128


def _round_up(v, m):
    return (v + m - 1) // m * m


# ----------------------------------------------------------------------------
# Kernel body: one (tm, hid_pad) output tile per grid step.
# ----------------------------------------------------------------------------
def _embed_kernel(x_ref, w1_ref, b1_ref, w2_ref, b2_ref, o_ref):
    # Cast the streamed activation tile to bf16 on the VPU (no extra HBM pass);
    # MXU accumulates in f32.
    x = x_ref[...].astype(jnp.bfloat16)
    h = jnp.dot(x, w1_ref[...], preferred_element_type=jnp.float32)
    # Bias add + ReLU in f32 on the VPU.
    h = jnp.maximum(h + b1_ref[...], 0.0)
    # Second linear: only the dot input is rounded to bf16, acc stays f32.
    y = jnp.dot(h.astype(jnp.bfloat16), w2_ref[...],
                preferred_element_type=jnp.float32)
    o_ref[...] = (y + b2_ref[...]).astype(o_ref.dtype)


# ----------------------------------------------------------------------------
# One-time parameter preparation (hoisted out of the forward path).
# ----------------------------------------------------------------------------
def prepare_embed_params(w1, b1, w2, b2):
    """Pad + cast the weights once.  Weights are stored (in, out):
    y = relu(x @ w1 + b1) @ w2 + b2.  Zero padding of K/N is exact."""
    in_size, hidden = w1.shape
    assert w2.shape == (hidden, hidden)
    in_pad = _round_up(in_size, _LANE)
    hid_pad = _round_up(hidden, _LANE)

    w1p = jnp.zeros((in_pad, hid_pad), jnp.bfloat16).at[:in_size, :hidden].set(
        w1.astype(jnp.bfloat16))
    w2p = jnp.zeros((hid_pad, hid_pad), jnp.bfloat16).at[:hidden, :hidden].set(
        w2.astype(jnp.bfloat16))
    b1p = jnp.zeros((1, hid_pad), jnp.float32).at[:, :hidden].set(
        jnp.reshape(b1, (1, hidden)).astype(jnp.float32))
    b2p = jnp.zeros((1, hid_pad), jnp.float32).at[:, :hidden].set(
        jnp.reshape(b2, (1, hidden)).astype(jnp.float32))
    return dict(w1=w1p, b1=b1p, w2=w2p, b2=b2p,
                in_size=in_size, hidden=hidden,
                in_pad=in_pad, hid_pad=hid_pad)


def _vmem_budget_bytes():
    try:
        cap = int(pltpu.get_tpu_info().vmem_capacity_bytes)
    except Exception:
        cap = 64 << 20  # conservative: v7x per-TC VMEM
    # ~3/4 of physical: ~96 MiB on v5e/v6e (128 MiB), ~48 MiB per TC on v7x.
    return (cap * 3) // 4


def _derive_tile(m, in_pad, hid_pad, x_bytes, out_bytes, budget, tm_max):
    """Pick the row tile tm from the VMEM budget left after resident weights."""
    # Resident (single-buffered) weights + biases.
    resident = (in_pad + hid_pad) * hid_pad * 2 + 2 * hid_pad * 4
    if resident >= budget:
        # TODO(synk): for hidden sizes where the single-buffered weights no
        # longer fit (~3.5-4K on v7x, ~5-6K on v5e/v6e), add a K/N-split grid
        # axis with an f32 accumulator scratch instead of keeping w2 resident.
        raise NotImplementedError(
            "Resident weights exceed the VMEM budget for this kernel variant.")
    # Per-row VMEM: double-buffered x / out tiles + f32/bf16 intermediates.
    per_row = (2 * in_pad * x_bytes + 2 * hid_pad * out_bytes
               + 4 * hid_pad * 4 + 2 * in_pad)
    tm = min(tm_max, max((budget - resident) // per_row, 16))
    if m <= tm:
        # A single tile covers all rows; round to bf16 sublane-pack granularity.
        tm = max(_round_up(m, 16), 16)
    else:
        # MXU-friendly multiple of 256 (min 16); keep >= 2 grid steps so v7x's
        # two TensorCores both get work under dimension_semantics="parallel".
        tm = max((tm // 256) * 256, 16)
        tm = min(tm, max(_round_up(pl.cdiv(m, 2), 16), 16))
    return tm, resident, per_row


# ----------------------------------------------------------------------------
# Forward pass.
# ----------------------------------------------------------------------------
def embed_forward(x, params, *, out_dtype=None, tm_max=1024):
    """Fused MLP forward: x (..., input_size) -> (..., hidden_size)."""
    in_size, hidden = params["in_size"], params["hidden"]
    in_pad, hid_pad = params["in_pad"], params["hid_pad"]
    assert x.shape[-1] == in_size
    lead = x.shape[:-1]
    out_dtype = x.dtype if out_dtype is None else jnp.dtype(out_dtype)

    x2d = x.reshape(-1, in_size)
    m = x2d.shape[0]

    budget = _vmem_budget_bytes()
    need_x_pad = (in_size != in_pad)
    x_bytes = 2 if need_x_pad else jnp.dtype(x2d.dtype).itemsize
    out_bytes = jnp.dtype(out_dtype).itemsize
    tm, resident, per_row = _derive_tile(
        m, in_pad, hid_pad, x_bytes, out_bytes, budget, tm_max)

    if not need_x_pad and m <= tm:
        tm = m  # full-extent block: zero-copy path for x
    m_pad = _round_up(m, tm)

    if need_x_pad or m_pad != m:
        # Only copy when genuinely needed; copy in bf16 to halve the pre-pass.
        xin = jnp.zeros((m_pad, in_pad), jnp.bfloat16).at[:m, :in_size].set(
            x2d.astype(jnp.bfloat16))
    else:
        xin = x2d  # streamed in its original dtype, cast in-kernel

    grid = (m_pad // tm,)
    footprint = resident + tm * per_row
    vmem_limit = int(min(budget, max(footprint + (16 << 20), 32 << 20)))

    flops = 2 * m_pad * hid_pad * (in_pad + hid_pad)
    bytes_accessed = (m_pad * in_pad * jnp.dtype(xin.dtype).itemsize
                      + (in_pad + hid_pad) * hid_pad * 2     # weights (bf16)
                      + 2 * hid_pad * 4                      # biases (f32)
                      + m_pad * hid_pad * out_bytes)         # output

    def _call(single_buffer_weights):
        res_kw = (dict(pipeline_mode=pl.Buffered(1))
                  if single_buffer_weights else {})
        in_specs = [
            pl.BlockSpec((tm, in_pad), lambda i: (i, 0)),              # x (pipelined)
            pl.BlockSpec((in_pad, hid_pad), lambda i: (0, 0), **res_kw),   # w1
            pl.BlockSpec((1, hid_pad), lambda i: (0, 0), **res_kw),        # b1
            pl.BlockSpec((hid_pad, hid_pad), lambda i: (0, 0), **res_kw),  # w2
            pl.BlockSpec((1, hid_pad), lambda i: (0, 0), **res_kw),        # b2
        ]
        return pl.pallas_call(
            _embed_kernel,
            out_shape=jax.ShapeDtypeStruct((m_pad, hid_pad), out_dtype),
            grid=grid,
            in_specs=in_specs,
            out_specs=pl.BlockSpec((tm, hid_pad), lambda i: (i, 0)),
            compiler_params=pltpu.CompilerParams(
                dimension_semantics=("parallel",),
                vmem_limit_bytes=vmem_limit),
            cost_estimate=pl.CostEstimate(
                flops=flops, transcendentals=0, bytes_accessed=bytes_accessed),
        )(xin, params["w1"], params["b1"], params["w2"], params["b2"])

    try:
        out = _call(True)
    except Exception:
        # Fallback for jax versions where pipeline_mode=pl.Buffered(1) on the
        # top-level pallas_call is not supported: default double buffering.
        out = _call(False)

    return out[:m, :hidden].reshape(*lead, hidden)


def init_embed_params(key, input_size, hidden_size, dtype=jnp.float32):
    """Mirror PyTorch nn.Linear default init: U[-1/sqrt(fan_in), 1/sqrt(fan_in)].
    Stored as (in, out) so the kernel can do x @ W directly."""
    k1, k2, k3, k4 = jax.random.split(key, 4)
    bound1 = 1.0 / (input_size ** 0.5)
    bound2 = 1.0 / (hidden_size ** 0.5)
    w1 = jax.random.uniform(k1, (input_size, hidden_size), dtype, -bound1, bound1)
    b1 = jax.random.uniform(k2, (1, hidden_size), dtype, -bound1, bound1)
    w2 = jax.random.uniform(k3, (hidden_size, hidden_size), dtype, -bound2, bound2)
    b2 = jax.random.uniform(k4, (1, hidden_size), dtype, -bound2, bound2)
    return w1, b1, w2, b2


if __name__ == "__main__":
    key = jax.random.PRNGKey(0)
    kx, kp = jax.random.split(key)

    # Small shapes consistent with the module: x is (..., input_size).
    batch, seq, input_size, hidden_size = 2, 8, 32, 32
    x = jax.random.normal(kx, (batch, seq, input_size), jnp.float32)
    w1, b1, w2, b2 = init_embed_params(kp, input_size, hidden_size)

    # One-time parameter preparation (hoisted out of the per-call path).
    params = prepare_embed_params(w1, b1, w2, b2)

    out = embed_forward(x, params)
    out = jax.block_until_ready(out)

    # Reference with the same bf16 rounding of matmul inputs + f32 accumulation
    # (matches kernel numerics to a few f32 ulps; differs from a pure-f32
    # PyTorch reference by design).
    xb = x.astype(jnp.bfloat16).astype(jnp.float32)
    w1b = w1.astype(jnp.bfloat16).astype(jnp.float32)
    w2b = w2.astype(jnp.bfloat16).astype(jnp.float32)
    h_ref = jnp.maximum(xb @ w1b + b1, 0.0)
    ref = h_ref.astype(jnp.bfloat16).astype(jnp.float32) @ w2b + b2

    assert out.shape == (batch, seq, hidden_size)
    assert jnp.allclose(out, ref, atol=1e-3, rtol=1e-3)

    print("KERNEL_OK")
</pallas_src>

<mosaic_0001>
module attributes {stable_mosaic.version = 11 : i64} {
  func.func @_embed_kernel(%arg0: i32, %arg1: memref<16x128xbf16, #tpu.memory_space<vmem>>, %arg2: memref<128x128xbf16, #tpu.memory_space<vmem>>, %arg3: memref<1x128xf32, #tpu.memory_space<vmem>>, %arg4: memref<128x128xbf16, #tpu.memory_space<vmem>>, %arg5: memref<1x128xf32, #tpu.memory_space<vmem>>, %arg6: memref<16x128xf32, #tpu.memory_space<vmem>>) attributes {dimension_semantics = [#tpu.dimension_semantics<parallel>], iteration_bounds = array<i64: 1>, scalar_prefetch = 0 : i64, scratch_operands = 0 : i64, tpu.core_type = #tpu.core_type<tc>, window_params = [{transform_indices = @transform_0, window_bounds = array<i64: 16, 128>}, {pipeline_mode = #tpu.pipeline_mode<synchronous>, transform_indices = @transform_1, window_bounds = array<i64: 128, 128>}, {pipeline_mode = #tpu.pipeline_mode<synchronous>, transform_indices = @transform_2, window_bounds = array<i64: 1, 128>}, {pipeline_mode = #tpu.pipeline_mode<synchronous>, transform_indices = @transform_3, window_bounds = array<i64: 128, 128>}, {pipeline_mode = #tpu.pipeline_mode<synchronous>, transform_indices = @transform_4, window_bounds = array<i64: 1, 128>}, {transform_indices = @transform_5, window_bounds = array<i64: 16, 128>}]} {
    %c0 = arith.constant 0 : index
    %c0_0 = arith.constant 0 : index
    %0 = vector.load %arg1[%c0, %c0_0] : memref<16x128xbf16, #tpu.memory_space<vmem>>, vector<16x128xbf16>
    %c0_1 = arith.constant 0 : index
    %c0_2 = arith.constant 0 : index
    %1 = vector.load %arg2[%c0_1, %c0_2] : memref<128x128xbf16, #tpu.memory_space<vmem>>, vector<128x128xbf16>
    %cst = arith.constant dense<0.000000e+00> : vector<16x128xf32>
    %2 = tpu.matmul %0, %1, %cst {dimension_numbers = #tpu.dot_dimension_numbers<[1], [0], [0], [1], [0, 0, 1, 1], [], []>} : vector<16x128xbf16>, vector<128x128xbf16>, vector<16x128xf32> -> vector<16x128xf32>
    %c0_3 = arith.constant 0 : index
    %c0_4 = arith.constant 0 : index
    %3 = vector.load %arg3[%c0_3, %c0_4] : memref<1x128xf32, #tpu.memory_space<vmem>>, vector<1x128xf32>
    %4 = vector.broadcast %3 : vector<1x128xf32> to vector<16x128xf32>
    %5 = arith.addf %2, %4 : vector<16x128xf32>
    %cst_5 = arith.constant 0.000000e+00 : f32
    %6 = vector.broadcast %cst_5 : f32 to vector<16x128xf32>
    %7 = arith.maximumf %5, %6 : vector<16x128xf32>
    %8 = arith.truncf %7 : vector<16x128xf32> to vector<16x128xbf16>
    %c0_6 = arith.constant 0 : index
    %c0_7 = arith.constant 0 : index
    %9 = vector.load %arg4[%c0_6, %c0_7] : memref<128x128xbf16, #tpu.memory_space<vmem>>, vector<128x128xbf16>
    %cst_8 = arith.constant dense<0.000000e+00> : vector<16x128xf32>
    %10 = tpu.matmul %8, %9, %cst_8 {dimension_numbers = #tpu.dot_dimension_numbers<[1], [0], [0], [1], [0, 0, 1, 1], [], []>} : vector<16x128xbf16>, vector<128x128xbf16>, vector<16x128xf32> -> vector<16x128xf32>
    %c0_9 = arith.constant 0 : index
    %c0_10 = arith.constant 0 : index
    %11 = vector.load %arg5[%c0_9, %c0_10] : memref<1x128xf32, #tpu.memory_space<vmem>>, vector<1x128xf32>
    %12 = vector.broadcast %11 : vector<1x128xf32> to vector<16x128xf32>
    %13 = arith.addf %10, %12 : vector<16x128xf32>
    %c0_11 = arith.constant 0 : index
    %c0_12 = arith.constant 0 : index
    %14 = vector.load %arg6[%c0_11, %c0_12] : memref<16x128xf32, #tpu.memory_space<vmem>>, vector<16x128xf32>
    tpu.vector_store %arg6[%c0_11, %c0_12], %13 {strides = array<i32>} : memref<16x128xf32, #tpu.memory_space<vmem>>, vector<16x128xf32>,
    return
  }
  func.func @transform_0(%arg0: i32) -> (i32, i32) {
    %c0_i32 = arith.constant 0 : i32
    %c0_i32_0 = arith.constant 0 : i32
    return %arg0, %c0_i32 : i32, i32
  }
  func.func @transform_1(%arg0: i32) -> (i32, i32) {
    %c0_i32 = arith.constant 0 : i32
    %c0_i32_0 = arith.constant 0 : i32
    %c0_i32_1 = arith.constant 0 : i32
    return %c0_i32, %c0_i32_0 : i32, i32
  }
  func.func @transform_2(%arg0: i32) -> (i32, i32) {
    %c0_i32 = arith.constant 0 : i32
    %c0_i32_0 = arith.constant 0 : i32
    %c0_i32_1 = arith.constant 0 : i32
    return %c0_i32, %c0_i32_0 : i32, i32
  }
  func.func @transform_3(%arg0: i32) -> (i32, i32) {
    %c0_i32 = arith.constant 0 : i32
    %c0_i32_0 = arith.constant 0 : i32
    %c0_i32_1 = arith.constant 0 : i32
    return %c0_i32, %c0_i32_0 : i32, i32
  }
  func.func @transform_4(%arg0: i32) -> (i32, i32) {
    %c0_i32 = arith.constant 0 : i32
    %c0_i32_0 = arith.constant 0 : i32
    %c0_i32_1 = arith.constant 0 : i32
    return %c0_i32, %c0_i32_0 : i32, i32
  }
  func.func @transform_5(%arg0: i32) -> (i32, i32) {
    %c0_i32 = arith.constant 0 : i32
    %c0_i32_0 = arith.constant 0 : i32
    return %arg0, %c0_i32 : i32, i32
  }
}

module attributes {stable_mosaic.version = 11 : i64} {
  func.func @_embed_kernel(%arg0: i32, %arg1: memref<16x128xbf16, #tpu.memory_space<vmem>>, %arg2: memref<128x128xbf16, #tpu.memory_space<vmem>>, %arg3: memref<1x128xf32, #tpu.memory_space<vmem>>, %arg4: memref<128x128xbf16, #tpu.memory_space<vmem>>, %arg5: memref<1x128xf32, #tpu.memory_space<vmem>>, %arg6: memref<16x128xf32, #tpu.memory_space<vmem>>) attributes {dimension_semantics = [#tpu.dimension_semantics<parallel>], iteration_bounds = array<i64: 1>, scalar_prefetch = 0 : i64, scratch_operands = 0 : i64, tpu.core_type = #tpu.core_type<tc>, window_params = [{transform_indices = @transform_0, window_bounds = array<i64: 16, 128>}, {pipeline_mode = #tpu.pipeline_mode<synchronous>, transform_indices = @transform_1, window_bounds = array<i64: 128, 128>}, {pipeline_mode = #tpu.pipeline_mode<synchronous>, transform_indices = @transform_2, window_bounds = array<i64: 1, 128>}, {pipeline_mode = #tpu.pipeline_mode<synchronous>, transform_indices = @transform_3, window_bounds = array<i64: 128, 128>}, {pipeline_mode = #tpu.pipeline_mode<synchronous>, transform_indices = @transform_4, window_bounds = array<i64: 1, 128>}, {transform_indices = @transform_5, window_bounds = array<i64: 16, 128>}]} {
    %c0 = arith.constant 0 : index
    %c0_0 = arith.constant 0 : index
    %0 = vector.load %arg1[%c0, %c0_0] : memref<16x128xbf16, #tpu.memory_space<vmem>>, vector<16x128xbf16>
    %c0_1 = arith.constant 0 : index
    %c0_2 = arith.constant 0 : index
    %1 = vector.load %arg2[%c0_1, %c0_2] : memref<128x128xbf16, #tpu.memory_space<vmem>>, vector<128x128xbf16>
    %cst = arith.constant dense<0.000000e+00> : vector<16x128xf32>
    %2 = tpu.matmul %0, %1, %cst {dimension_numbers = #tpu.dot_dimension_numbers<[1], [0], [0], [1], [0, 0, 1, 1], [], []>} : vector<16x128xbf16>, vector<128x128xbf16>, vector<16x128xf32> -> vector<16x128xf32>
    %c0_3 = arith.constant 0 : index
    %c0_4 = arith.constant 0 : index
    %3 = vector.load %arg3[%c0_3, %c0_4] : memref<1x128xf32, #tpu.memory_space<vmem>>, vector<1x128xf32>
    %4 = vector.broadcast %3 : vector<1x128xf32> to vector<16x128xf32>
    %5 = arith.addf %2, %4 : vector<16x128xf32>
    %cst_5 = arith.constant 0.000000e+00 : f32
    %6 = vector.broadcast %cst_5 : f32 to vector<16x128xf32>
    %7 = arith.maximumf %5, %6 : vector<16x128xf32>
    %8 = arith.truncf %7 : vector<16x128xf32> to vector<16x128xbf16>
    %c0_6 = arith.constant 0 : index
    %c0_7 = arith.constant 0 : index
    %9 = vector.load %arg4[%c0_6, %c0_7] : memref<128x128xbf16, #tpu.memory_space<vmem>>, vector<128x128xbf16>
    %cst_8 = arith.constant dense<0.000000e+00> : vector<16x128xf32>
    %10 = tpu.matmul %8, %9, %cst_8 {dimension_numbers = #tpu.dot_dimension_numbers<[1], [0], [0], [1], [0, 0, 1, 1], [], []>} : vector<16x128xbf16>, vector<128x128xbf16>, vector<16x128xf32> -> vector<16x128xf32>
    %c0_9 = arith.constant 0 : index
    %c0_10 = arith.constant 0 : index
    %11 = vector.load %arg5[%c0_9, %c0_10] : memref<1x128xf32, #tpu.memory_space<vmem>>, vector<1x128xf32>
    %12 = vector.broadcast %11 : vector<1x128xf32> to vector<16x128xf32>
    %13 = arith.addf %10, %12 : vector<16x128xf32>
    %c0_11 = arith.constant 0 : index
    %c0_12 = arith.constant 0 : index
    %14 = vector.load %arg6[%c0_11, %c0_12] : memref<16x128xf32, #tpu.memory_space<vmem>>, vector<16x128xf32>
    tpu.vector_store %arg6[%c0_11, %c0_12], %13 {strides = array<i32>} : memref<16x128xf32, #tpu.memory_space<vmem>>, vector<16x128xf32>,
    return
  }
  func.func @transform_0(%arg0: i32) -> (i32, i32) {
    %c0_i32 = arith.constant 0 : i32
    %c0_i32_0 = arith.constant 0 : i32
    return %arg0, %c0_i32 : i32, i32
  }
  func.func @transform_1(%arg0: i32) -> (i32, i32) {
    %c0_i32 = arith.constant 0 : i32
    %c0_i32_0 = arith.constant 0 : i32
    %c0_i32_1 = arith.constant 0 : i32
    return %c0_i32, %c0_i32_0 : i32, i32
  }
  func.func @transform_2(%arg0: i32) -> (i32, i32) {
    %c0_i32 = arith.constant 0 : i32
    %c0_i32_0 = arith.constant 0 : i32
    %c0_i32_1 = arith.constant 0 : i32
    return %c0_i32, %c0_i32_0 : i32, i32
  }
  func.func @transform_3(%arg0: i32) -> (i32, i32) {
    %c0_i32 = arith.constant 0 : i32
    %c0_i32_0 = arith.constant 0 : i32
    %c0_i32_1 = arith.constant 0 : i32
    return %c0_i32, %c0_i32_0 : i32, i32
  }
  func.func @transform_4(%arg0: i32) -> (i32, i32) {
    %c0_i32 = arith.constant 0 : i32
    %c0_i32_0 = arith.constant 0 : i32
    %c0_i32_1 = arith.constant 0 : i32
    return %c0_i32, %c0_i32_0 : i32, i32
  }
  func.func @transform_5(%arg0: i32) -> (i32, i32) {
    %c0_i32 = arith.constant 0 : i32
    %c0_i32_0 = arith.constant 0 : i32
    return %arg0, %c0_i32 : i32, i32
  }
}

</mosaic_0001>

<llo_original>
// kernel: tpu_custom_call.1
$region0: #{tpu_custom_call.1}
  #allocation0 [shape = 'u32[]', space=smem, size = 0x4, offset = 0x4, fixed_abs, tag = 'smem constant byte address 0x4 - core index']
  #allocation1 [shape = 'u32[144,128]{1,0:T(1,128)}', space=vmem, size = 0x12000, scoped, tag = 'internal scratch']
  %s0 = inlined_call_operand.hbm [shape: bf16[16,128], index: 0, kind: input, shape index: {}]
  %s1 = inlined_call_operand.hbm [shape: bf16[128,128], index: 1, kind: input, shape index: {}]
  %s2 = inlined_call_operand.vmem [shape: f32[1,128], index: 2, kind: input, shape index: {}]
  %s3 = inlined_call_operand.hbm [shape: bf16[128,128], index: 3, kind: input, shape index: {}]
  %s4 = inlined_call_operand.vmem [shape: f32[1,128], index: 4, kind: input, shape index: {}]
  %s5 = inlined_call_operand.hbm [shape: f32[16,128], index: 5, kind: output, shape index: {}]
  %s6 = sld [smem:[#allocation0]]
  $region42: #{tpu_custom_call.1} parent=0
    _
  %s8 = ssub.s32 1, %s6
  %s9 = scalar_select 0, %s8, %s6
  $region1: #{tpu_custom_call.1} parent=0
    #allocation2 [shape = 'u8[4096]{0}', space=vmem, size = 0x1000, scoped, tag = 'input window, operand 0, single buffered']
    #allocation3 [shape = 's32[1]{0}', space=sflag, size = 0x4, scoped, tag = 'scoped memory for tpu_custom_call.1']
    #allocation4 [shape = 's32[1]{0}', space=sflag, size = 0x4, scoped, tag = 'scoped memory for tpu_custom_call.1']
    #allocation5 [shape = 'u8[32768]{0}', space=vmem, size = 0x8000, scoped, tag = 'input window, operand 1, single buffered']
    #allocation6 [shape = 's32[1]{0}', space=sflag, size = 0x4, scoped, tag = 'scoped memory for tpu_custom_call.1']
    #allocation7 [shape = 'u8[32768]{0}', space=vmem, size = 0x8000, scoped, tag = 'input window, operand 3, single buffered']
    #allocation8 [shape = 'u8[8192]{0}', space=vmem, size = 0x2000, scoped, tag = 'output window, operand 0, single buffered']
    %10 = vsyncpa [#allocation3], 0
    %11 = vsyncpa [#allocation6], 0
    %12 = vsyncpa [#allocation4], 0
    // Predicated region
    $region2: #{tpu_custom_call.1} parent=1 // pred_check
      _
    $region3: #{tpu_custom_call.1} parent=1 // pred_check_branch
      %14 = sbr.rel (0) target = $region5
    $region4: #{tpu_custom_call.1} parent=1 // pred_region
      %s16 = ssub.s32 128, 128
      %17 = vsyncadd [#allocation3], %s16
      %s18 = sshll.u32 [#allocation2], 4
      %s19 = int_to_ptr.vmem [resolvable:$true] %s18
      %24 = dma.hbm_to_vmem [thread:$0]  %s0, 128, %s19, [#allocation3], 64, 64, 4
    $region5: #{tpu_custom_call.1} parent=1 // pred_fallthru
      _
    // Predicated region
    $region6: #{tpu_custom_call.1} parent=1 // pred_check
      _
    $region7: #{tpu_custom_call.1} parent=1 // pred_check_branch
      %26 = sbr.rel (0) target = $region9
    $region8: #{tpu_custom_call.1} parent=1 // pred_region
      %s28 = ssub.s32 1024, 1024
      %29 = vsyncadd [#allocation6], %s28
      %s30 = sshll.u32 [#allocation5], 4
      %s31 = int_to_ptr.vmem [resolvable:$true] %s30
      %36 = dma.hbm_to_vmem [thread:$0]  %s1, 1024, %s31, [#allocation6], 64, 64, 4
    $region9: #{tpu_custom_call.1} parent=1 // pred_fallthru
      _
    // Predicated region
    $region10: #{tpu_custom_call.1} parent=1 // pred_check
      _
    $region11: #{tpu_custom_call.1} parent=1 // pred_check_branch
      %38 = sbr.rel (0) target = $region13
    $region12: #{tpu_custom_call.1} parent=1 // pred_region
      _
    $region13: #{tpu_custom_call.1} parent=1 // pred_fallthru
      _
    // Predicated region
    $region14: #{tpu_custom_call.1} parent=1 // pred_check
      _
    $region15: #{tpu_custom_call.1} parent=1 // pred_check_branch
      %40 = sbr.rel (0) target = $region17
    $region16: #{tpu_custom_call.1} parent=1 // pred_region
      %s42 = ssub.s32 1024, 1024
      %43 = vsyncadd [#allocation6], %s42
      %s44 = sshll.u32 [#allocation7], 4
      %s45 = int_to_ptr.vmem [resolvable:$true] %s44
      %50 = dma.hbm_to_vmem [thread:$0]  %s3, 1024, %s45, [#allocation6], 64, 64, 4
    $region17: #{tpu_custom_call.1} parent=1 // pred_fallthru
      _
    // Predicated region
    $region18: #{tpu_custom_call.1} parent=1 // pred_check
      _
    $region19: #{tpu_custom_call.1} parent=1 // pred_check_branch
      %52 = sbr.rel (0) target = $region21
    $region20: #{tpu_custom_call.1} parent=1 // pred_region
      _
    $region21: #{tpu_custom_call.1} parent=1 // pred_fallthru
      _
    // Predicated region
    $region22: #{tpu_custom_call.1} parent=1 // pred_check
      _
    $region23: #{tpu_custom_call.1} parent=1 // pred_check_branch
      %54 = sbr.rel (0) target = $region25
    $region24: #{tpu_custom_call.1} parent=1 // pred_region
      %55 = dma.done [#allocation3], 128
    $region25: #{tpu_custom_call.1} parent=1 // pred_fallthru
      _
    // Predicated region
    $region26: #{tpu_custom_call.1} parent=1 // pred_check
      _
    $region27: #{tpu_custom_call.1} parent=1 // pred_check_branch
      %57 = sbr.rel (0) target = $region29
    $region28: #{tpu_custom_call.1} parent=1 // pred_region
      %58 = dma.done [#allocation6], 1024
    $region29: #{tpu_custom_call.1} parent=1 // pred_fallthru
      _
    // Predicated region
    $region30: #{tpu_custom_call.1} parent=1 // pred_check
      _
    $region31: #{tpu_custom_call.1} parent=1 // pred_check_branch
      %60 = sbr.rel (0) target = $region33
    $region32: #{tpu_custom_call.1} parent=1 // pred_region
      %61 = dma.done [#allocation6], 1024
    $region33: #{tpu_custom_call.1} parent=1 // pred_fallthru
      _
    %v63 = vld [vmem:[#allocation2] sm:$0xf]
    %v64 = vld [vmem:[#allocation2 + $0x4] sm:$0xf]
    %v65 = vld [vmem:[#allocation5] sm:$0xf]
    %v66 = vld [vmem:[#allocation5 + $0x4] sm:$0xf]
    %v67 = vld [vmem:[#allocation5 + $0x8] sm:$0xf]
    %v68 = vld [vmem:[#allocation5 + $0xc] sm:$0xf]
    %v69 = vld [vmem:[#allocation5 + $0x10] sm:$0xf]
    %v70 = vld [vmem:[#allocation5 + $0x14] sm:$0xf]
    %v71 = vld [vmem:[#allocation5 + $0x18] sm:$0xf]
    %v72 = vld [vmem:[#allocation5 + $0x1c] sm:$0xf]
    %v73 = vld [vmem:[#allocation5 + $0x20] sm:$0xf]
    %v74 = vld [vmem:[#allocation5 + $0x24] sm:$0xf]
    %v75 = vld [vmem:[#allocation5 + $0x28] sm:$0xf]
    %v76 = vld [vmem:[#allocation5 + $0x2c] sm:$0xf]
    %v77 = vld [vmem:[#allocation5 + $0x30] sm:$0xf]
    %v78 = vld [vmem:[#allocation5 + $0x34] sm:$0xf]
    %v79 = vld [vmem:[#allocation5 + $0x38] sm:$0xf]
    %v80 = vld [vmem:[#allocation5 + $0x3c] sm:$0xf]
    %v81 = vld [vmem:[%s2] sm:$0x1]
    %v83 = vlaneseq
    %v84 = vshrl.u32 %v83, 7
    %v85 = vsub.s32 0, %v84
    %v86 = vrot.slane %v81, %v85
    %v90 = vunpack.c.l.b16 %v63
    %v91 = vunpack.c.l.b16 %v64
    %v92 = vpack.c.b16 %v91, %v90
    %v110 = vunpack.c.l.b16 %v65
    %v111 = vunpack.c.l.b16 %v66
    %v112 = vunpack.c.l.b16 %v67
    %v113 = vunpack.c.l.b16 %v68
    %v114 = vunpack.c.l.b16 %v69
    %v115 = vunpack.c.l.b16 %v70
    %v116 = vunpack.c.l.b16 %v71
    %v117 = vunpack.c.l.b16 %v72
    %v118 = vunpack.c.l.b16 %v73
    %v119 = vunpack.c.l.b16 %v74
    %v120 = vunpack.c.l.b16 %v75
    %v121 = vunpack.c.l.b16 %v76
    %v122 = vunpack.c.l.b16 %v77
    %v123 = vunpack.c.l.b16 %v78
    %v124 = vunpack.c.l.b16 %v79
    %v125 = vunpack.c.l.b16 %v80
    %v126 = vpack.c.b16 %v111, %v110
    %v127 = vpack.c.b16 %v113, %v112
    %v128 = vpack.c.b16 %v115, %v114
    %v129 = vpack.c.b16 %v117, %v116
    %v130 = vpack.c.b16 %v119, %v118
    %v131 = vpack.c.b16 %v121, %v120
    %v132 = vpack.c.b16 %v123, %v122
    %v133 = vpack.c.b16 %v125, %v124
    %142 = vmatprep.subr.bf16.mxu0 0
    %143 = vmatpush1.bf16.msra.mxu0 %v126
    %144 = vmatprep.subr.bf16.mxu0 0
    %145 = vmatpush1.bf16.msra.mxu0 %v127
    %146 = vmatprep.subr.bf16.mxu0 0
    %147 = vmatpush1.bf16.msra.mxu0 %v128
    %148 = vmatprep.subr.bf16.mxu0 0
    %149 = vmatpush1.bf16.msra.mxu0 %v129
    %150 = vmatprep.subr.bf16.mxu0 0
    %151 = vmatpush1.bf16.msra.mxu0 %v130
    %152 = vmatprep.subr.bf16.mxu0 0
    %153 = vmatpush1.bf16.msra.mxu0 %v131
    %154 = vmatprep.subr.bf16.mxu0 0
    %155 = vmatpush1.bf16.msra.mxu0 %v132
    %156 = vmatprep.subr.bf16.mxu0 0
    %157 = vmatpush1.bf16.msra.mxu0 %v133
    %158 = vmatprep.subr.bf16.mxu0 0
    %159 = vmatpush1.bf16.msra.mxu0 0
    %160 = vmatprep.subr.bf16.mxu0 0
    %161 = vmatpush1.bf16.msra.mxu0 0
    %162 = vmatprep.subr.bf16.mxu0 0
    %163 = vmatpush1.bf16.msra.mxu0 0
    %164 = vmatprep.subr.bf16.mxu0 0
    %165 = vmatpush1.bf16.msra.mxu0 0
    %166 = vmatprep.subr.bf16.mxu0 0
    %167 = vmatpush1.bf16.msra.mxu0 0
    %168 = vmatprep.subr.bf16.mxu0 0
    %169 = vmatpush1.bf16.msra.mxu0 0
    %170 = vmatprep.subr.bf16.mxu0 0
    %171 = vmatpush1.bf16.msra.mxu0 0
    %172 = vmatprep.subr.bf16.mxu0 0
    %173 = vmatpush1.bf16.msra.mxu0 0
    %174 = vmatprep.mubr.bf16.mxu0 0
    %175 = vmatmul.mubr.bf16.gmra.mrb[0].mxu0 %v92
    %v176 = vpop.f32.mrb[0].mxu0
    %v177 = vadd.f32 %v86, %v176
    %v178 = vpop.f32.mrb[0].mxu0
    %v179 = vpop.f32.mrb[0].mxu0
    %v180 = vadd.f32 %v86, %v179
    %v181 = vpop.f32.mrb[0].mxu0
    %182 = vdwg.mxu0
    %v183 = vmax.f32 %v177, 0.0
    %v184 = vmax.f32 %v180, 0.0
    %v185 = vpack.c.bf16 %v184, %v183
    %v186 = vld [vmem:[#allocation7] sm:$0xf]
    %v187 = vld [vmem:[#allocation7 + $0x4] sm:$0xf]
    %v188 = vld [vmem:[#allocation7 + $0x8] sm:$0xf]
    %v189 = vld [vmem:[#allocation7 + $0xc] sm:$0xf]
    %v190 = vld [vmem:[#allocation7 + $0x10] sm:$0xf]
    %v191 = vld [vmem:[#allocation7 + $0x14] sm:$0xf]
    %v192 = vld [vmem:[#allocation7 + $0x18] sm:$0xf]
    %v193 = vld [vmem:[#allocation7 + $0x1c] sm:$0xf]
    %v194 = vld [vmem:[#allocation7 + $0x20] sm:$0xf]
    %v195 = vld [vmem:[#allocation7 + $0x24] sm:$0xf]
    %v196 = vld [vmem:[#allocation7 + $0x28] sm:$0xf]
    %v197 = vld [vmem:[#allocation7 + $0x2c] sm:$0xf]
    %v198 = vld [vmem:[#allocation7 + $0x30] sm:$0xf]
    %v199 = vld [vmem:[#allocation7 + $0x34] sm:$0xf]
    %v200 = vld [vmem:[#allocation7 + $0x38] sm:$0xf]
    %v201 = vld [vmem:[#allocation7 + $0x3c] sm:$0xf]
    %v202 = vld [vmem:[%s4] sm:$0x1]
    %v204 = vlaneseq
    %v205 = vshrl.u32 %v204, 7
    %v206 = vsub.s32 0, %v205
    %v207 = vrot.slane %v202, %v206
    %v225 = vunpack.c.l.b16 %v186
    %v226 = vunpack.c.l.b16 %v187
    %v227 = vunpack.c.l.b16 %v188
    %v228 = vunpack.c.l.b16 %v189
    %v229 = vunpack.c.l.b16 %v190
    %v230 = vunpack.c.l.b16 %v191
    %v231 = vunpack.c.l.b16 %v192
    %v232 = vunpack.c.l.b16 %v193
    %v233 = vunpack.c.l.b16 %v194
    %v234 = vunpack.c.l.b16 %v195
    %v235 = vunpack.c.l.b16 %v196
    %v236 = vunpack.c.l.b16 %v197
    %v237 = vunpack.c.l.b16 %v198
    %v238 = vunpack.c.l.b16 %v199
    %v239 = vunpack.c.l.b16 %v200
    %v240 = vunpack.c.l.b16 %v201
    %v241 = vpack.c.b16 %v226, %v225
    %v242 = vpack.c.b16 %v228, %v227
    %v243 = vpack.c.b16 %v230, %v229
    %v244 = vpack.c.b16 %v232, %v231
    %v245 = vpack.c.b16 %v234, %v233
    %v246 = vpack.c.b16 %v236, %v235
    %v247 = vpack.c.b16 %v238, %v237
    %v248 = vpack.c.b16 %v240, %v239
    %257 = vmatprep.subr.bf16.mxu0 0
    %258 = vmatpush1.bf16.msra.mxu0 %v241
    %259 = vmatprep.subr.bf16.mxu0 0
    %260 = vmatpush1.bf16.msra.mxu0 %v242
    %261 = vmatprep.subr.bf16.mxu0 0
    %262 = vmatpush1.bf16.msra.mxu0 %v243
    %263 = vmatprep.subr.bf16.mxu0 0
    %264 = vmatpush1.bf16.msra.mxu0 %v244
    %265 = vmatprep.subr.bf16.mxu0 0
    %266 = vmatpush1.bf16.msra.mxu0 %v245
    %267 = vmatprep.subr.bf16.mxu0 0
    %268 = vmatpush1.bf16.msra.mxu0 %v246
    %269 = vmatprep.subr.bf16.mxu0 0
    %270 = vmatpush1.bf16.msra.mxu0 %v247
    %271 = vmatprep.subr.bf16.mxu0 0
    %272 = vmatpush1.bf16.msra.mxu0 %v248
    %273 = vmatprep.subr.bf16.mxu0 0
    %274 = vmatpush1.bf16.msra.mxu0 0
    %275 = vmatprep.subr.bf16.mxu0 0
    %276 = vmatpush1.bf16.msra.mxu0 0
    %277 = vmatprep.subr.bf16.mxu0 0
    %278 = vmatpush1.bf16.msra.mxu0 0
    %279 = vmatprep.subr.bf16.mxu0 0
    %280 = vmatpush1.bf16.msra.mxu0 0
    %281 = vmatprep.subr.bf16.mxu0 0
    %282 = vmatpush1.bf16.msra.mxu0 0
    %283 = vmatprep.subr.bf16.mxu0 0
    %284 = vmatpush1.bf16.msra.mxu0 0
    %285 = vmatprep.subr.bf16.mxu0 0
    %286 = vmatpush1.bf16.msra.mxu0 0
    %287 = vmatprep.subr.bf16.mxu0 0
    %288 = vmatpush1.bf16.msra.mxu0 0
    %289 = vmatprep.mubr.bf16.mxu0 0
    %290 = vmatmul.mubr.bf16.gmra.mrb[0].mxu0 %v185
    %v291 = vpop.f32.mrb[0].mxu0
    %v292 = vadd.f32 %v207, %v291
    %v293 = vpop.f32.mrb[0].mxu0
    %v294 = vpop.f32.mrb[0].mxu0
    %v295 = vadd.f32 %v207, %v294
    %v296 = vpop.f32.mrb[0].mxu0
    %297 = vdwg.mxu0
    %298 = vst [vmem:[#allocation8] sm:$0xff] %v292
    %299 = vst [vmem:[#allocation8 + $0x8] sm:$0xff] %v295
    // Predicated region
    $region34: #{tpu_custom_call.1} parent=1 // pred_check
      _
    $region35: #{tpu_custom_call.1} parent=1 // pred_check_branch
      %301 = sbr.rel (0) target = $region37
    $region36: #{tpu_custom_call.1} parent=1 // pred_region
      %s303 = ssub.s32 256, 256
      %304 = vsyncadd [#allocation4], %s303
      %s305 = sshll.u32 [#allocation8], 4
      %s306 = int_to_ptr.vmem [resolvable:$true] %s305
      %311 = dma.vmem_to_hbm [thread:$0]  %s306, 256, %s5, [#allocation4], 128, 128, 8
    $region37: #{tpu_custom_call.1} parent=1 // pred_fallthru
      _
    // Predicated region
    $region38: #{tpu_custom_call.1} parent=1 // pred_check
      _
    $region39: #{tpu_custom_call.1} parent=1 // pred_check_branch
      %313 = sbr.rel (0) target = $region41
    $region40: #{tpu_custom_call.1} parent=1 // pred_region
      %314 = dma.done [#allocation4], 256
    $region41: #{tpu_custom_call.1} parent=1 // pred_fallthru
      _
    %315 = vsyncpa [#allocation3], 1
    %316 = vsyncpa [#allocation6], 1
    %317 = vsyncpa [#allocation4], 1

// kernel: tpu_custom_call.1
$region0: #{tpu_custom_call.1}
  #allocation0 [shape = 'u32[]', space=smem, size = 0x4, offset = 0x4, fixed_abs, tag = 'smem constant byte address 0x4 - core index']
  #allocation1 [shape = 'u32[144,128]{1,0:T(1,128)}', space=vmem, size = 0x12000, scoped, tag = 'internal scratch']
  %s0 = inlined_call_operand.hbm [shape: bf16[16,128], index: 0, kind: input, shape index: {}]
  %s1 = inlined_call_operand.hbm [shape: bf16[128,128], index: 1, kind: input, shape index: {}]
  %s2 = inlined_call_operand.vmem [shape: f32[1,128], index: 2, kind: input, shape index: {}]
  %s3 = inlined_call_operand.hbm [shape: bf16[128,128], index: 3, kind: input, shape index: {}]
  %s4 = inlined_call_operand.vmem [shape: f32[1,128], index: 4, kind: input, shape index: {}]
  %s5 = inlined_call_operand.hbm [shape: f32[16,128], index: 5, kind: output, shape index: {}]
  %s6 = sld [smem:[#allocation0]]
  $region42: #{tpu_custom_call.1} parent=0
    _
  %s8 = ssub.s32 1, %s6
  %s9 = scalar_select 0, %s8, %s6
  $region1: #{tpu_custom_call.1} parent=0
    #allocation2 [shape = 'u8[4096]{0}', space=vmem, size = 0x1000, scoped, tag = 'input window, operand 0, single buffered']
    #allocation3 [shape = 's32[1]{0}', space=sflag, size = 0x4, scoped, tag = 'scoped memory for tpu_custom_call.1']
    #allocation4 [shape = 's32[1]{0}', space=sflag, size = 0x4, scoped, tag = 'scoped memory for tpu_custom_call.1']
    #allocation5 [shape = 'u8[32768]{0}', space=vmem, size = 0x8000, scoped, tag = 'input window, operand 1, single buffered']
    #allocation6 [shape = 's32[1]{0}', space=sflag, size = 0x4, scoped, tag = 'scoped memory for tpu_custom_call.1']
    #allocation7 [shape = 'u8[32768]{0}', space=vmem, size = 0x8000, scoped, tag = 'input window, operand 3, single buffered']
    #allocation8 [shape = 'u8[8192]{0}', space=vmem, size = 0x2000, scoped, tag = 'output window, operand 0, single buffered']
    %10 = vsyncpa [#allocation3], 0
    %11 = vsyncpa [#allocation6], 0
    %12 = vsyncpa [#allocation4], 0
    // Predicated region
    $region2: #{tpu_custom_call.1} parent=1 // pred_check
      _
    $region3: #{tpu_custom_call.1} parent=1 // pred_check_branch
      %14 = sbr.rel (0) target = $region5
    $region4: #{tpu_custom_call.1} parent=1 // pred_region
      %s16 = ssub.s32 128, 128
      %17 = vsyncadd [#allocation3], %s16
      %s18 = sshll.u32 [#allocation2], 4
      %s19 = int_to_ptr.vmem [resolvable:$true] %s18
      %24 = dma.hbm_to_vmem [thread:$0]  %s0, 128, %s19, [#allocation3], 64, 64, 4
    $region5: #{tpu_custom_call.1} parent=1 // pred_fallthru
      _
    // Predicated region
    $region6: #{tpu_custom_call.1} parent=1 // pred_check
      _
    $region7: #{tpu_custom_call.1} parent=1 // pred_check_branch
      %26 = sbr.rel (0) target = $region9
    $region8: #{tpu_custom_call.1} parent=1 // pred_region
      %s28 = ssub.s32 1024, 1024
      %29 = vsyncadd [#allocation6], %s28
      %s30 = sshll.u32 [#allocation5], 4
      %s31 = int_to_ptr.vmem [resolvable:$true] %s30
      %36 = dma.hbm_to_vmem [thread:$0]  %s1, 1024, %s31, [#allocation6], 64, 64, 4
    $region9: #{tpu_custom_call.1} parent=1 // pred_fallthru
      _
    // Predicated region
    $region10: #{tpu_custom_call.1} parent=1 // pred_check
      _
    $region11: #{tpu_custom_call.1} parent=1 // pred_check_branch
      %38 = sbr.rel (0) target = $region13
    $region12: #{tpu_custom_call.1} parent=1 // pred_region
      _
    $region13: #{tpu_custom_call.1} parent=1 // pred_fallthru
      _
    // Predicated region
    $region14: #{tpu_custom_call.1} parent=1 // pred_check
      _
    $region15: #{tpu_custom_call.1} parent=1 // pred_check_branch
      %40 = sbr.rel (0) target = $region17
    $region16: #{tpu_custom_call.1} parent=1 // pred_region
      %s42 = ssub.s32 1024, 1024
      %43 = vsyncadd [#allocation6], %s42
      %s44 = sshll.u32 [#allocation7], 4
      %s45 = int_to_ptr.vmem [resolvable:$true] %s44
      %50 = dma.hbm_to_vmem [thread:$0]  %s3, 1024, %s45, [#allocation6], 64, 64, 4
    $region17: #{tpu_custom_call.1} parent=1 // pred_fallthru
      _
    // Predicated region
    $region18: #{tpu_custom_call.1} parent=1 // pred_check
      _
    $region19: #{tpu_custom_call.1} parent=1 // pred_check_branch
      %52 = sbr.rel (0) target = $region21
    $region20: #{tpu_custom_call.1} parent=1 // pred_region
      _
    $region21: #{tpu_custom_call.1} parent=1 // pred_fallthru
      _
    // Predicated region
    $region22: #{tpu_custom_call.1} parent=1 // pred_check
      _
    $region23: #{tpu_custom_call.1} parent=1 // pred_check_branch
      %54 = sbr.rel (0) target = $region25
    $region24: #{tpu_custom_call.1} parent=1 // pred_region
      %55 = dma.done [#allocation3], 128
    $region25: #{tpu_custom_call.1} parent=1 // pred_fallthru
      _
    // Predicated region
    $region26: #{tpu_custom_call.1} parent=1 // pred_check
      _
    $region27: #{tpu_custom_call.1} parent=1 // pred_check_branch
      %57 = sbr.rel (0) target = $region29
    $region28: #{tpu_custom_call.1} parent=1 // pred_region
      %58 = dma.done [#allocation6], 1024
    $region29: #{tpu_custom_call.1} parent=1 // pred_fallthru
      _
    // Predicated region
    $region30: #{tpu_custom_call.1} parent=1 // pred_check
      _
    $region31: #{tpu_custom_call.1} parent=1 // pred_check_branch
      %60 = sbr.rel (0) target = $region33
    $region32: #{tpu_custom_call.1} parent=1 // pred_region
      %61 = dma.done [#allocation6], 1024
    $region33: #{tpu_custom_call.1} parent=1 // pred_fallthru
      _
    %v63 = vld [vmem:[#allocation2] sm:$0xf]
    %v64 = vld [vmem:[#allocation2 + $0x4] sm:$0xf]
    %v65 = vld [vmem:[#allocation5] sm:$0xf]
    %v66 = vld [vmem:[#allocation5 + $0x4] sm:$0xf]
    %v67 = vld [vmem:[#allocation5 + $0x8] sm:$0xf]
    %v68 = vld [vmem:[#allocation5 + $0xc] sm:$0xf]
    %v69 = vld [vmem:[#allocation5 + $0x10] sm:$0xf]
    %v70 = vld [vmem:[#allocation5 + $0x14] sm:$0xf]
    %v71 = vld [vmem:[#allocation5 + $0x18] sm:$0xf]
    %v72 = vld [vmem:[#allocation5 + $0x1c] sm:$0xf]
    %v73 = vld [vmem:[#allocation5 + $0x20] sm:$0xf]
    %v74 = vld [vmem:[#allocation5 + $0x24] sm:$0xf]
    %v75 = vld [vmem:[#allocation5 + $0x28] sm:$0xf]
    %v76 = vld [vmem:[#allocation5 + $0x2c] sm:$0xf]
    %v77 = vld [vmem:[#allocation5 + $0x30] sm:$0xf]
    %v78 = vld [vmem:[#allocation5 + $0x34] sm:$0xf]
    %v79 = vld [vmem:[#allocation5 + $0x38] sm:$0xf]
    %v80 = vld [vmem:[#allocation5 + $0x3c] sm:$0xf]
    %v81 = vld [vmem:[%s2] sm:$0x1]
    %v83 = vlaneseq
    %v84 = vshrl.u32 %v83, 7
    %v85 = vsub.s32 0, %v84
    %v86 = vrot.slane %v81, %v85
    %v90 = vunpack.c.l.b16 %v63
    %v91 = vunpack.c.l.b16 %v64
    %v92 = vpack.c.b16 %v91, %v90
    %v110 = vunpack.c.l.b16 %v65
    %v111 = vunpack.c.l.b16 %v66
    %v112 = vunpack.c.l.b16 %v67
    %v113 = vunpack.c.l.b16 %v68
    %v114 = vunpack.c.l.b16 %v69
    %v115 = vunpack.c.l.b16 %v70
    %v116 = vunpack.c.l.b16 %v71
    %v117 = vunpack.c.l.b16 %v72
    %v118 = vunpack.c.l.b16 %v73
    %v119 = vunpack.c.l.b16 %v74
    %v120 = vunpack.c.l.b16 %v75
    %v121 = vunpack.c.l.b16 %v76
    %v122 = vunpack.c.l.b16 %v77
    %v123 = vunpack.c.l.b16 %v78
    %v124 = vunpack.c.l.b16 %v79
    %v125 = vunpack.c.l.b16 %v80
    %v126 = vpack.c.b16 %v111, %v110
    %v127 = vpack.c.b16 %v113, %v112
    %v128 = vpack.c.b16 %v115, %v114
    %v129 = vpack.c.b16 %v117, %v116
    %v130 = vpack.c.b16 %v119, %v118
    %v131 = vpack.c.b16 %v121, %v120
    %v132 = vpack.c.b16 %v123, %v122
    %v133 = vpack.c.b16 %v125, %v124
    %142 = vmatprep.subr.bf16.mxu0 0
    %143 = vmatpush1.bf16.msra.mxu0 %v126
    %144 = vmatprep.subr.bf16.mxu0 0
    %145 = vmatpush1.bf16.msra.mxu0 %v127
    %146 = vmatprep.subr.bf16.mxu0 0
    %147 = vmatpush1.bf16.msra.mxu0 %v128
    %148 = vmatprep.subr.bf16.mxu0 0
    %149 = vmatpush1.bf16.msra.mxu0 %v129
    %150 = vmatprep.subr.bf16.mxu0 0
    %151 = vmatpush1.bf16.msra.mxu0 %v130
    %152 = vmatprep.subr.bf16.mxu0 0
    %153 = vmatpush1.bf16.msra.mxu0 %v131
    %154 = vmatprep.subr.bf16.mxu0 0
    %155 = vmatpush1.bf16.msra.mxu0 %v132
    %156 = vmatprep.subr.bf16.mxu0 0
    %157 = vmatpush1.bf16.msra.mxu0 %v133
    %158 = vmatprep.subr.bf16.mxu0 0
    %159 = vmatpush1.bf16.msra.mxu0 0
    %160 = vmatprep.subr.bf16.mxu0 0
    %161 = vmatpush1.bf16.msra.mxu0 0
    %162 = vmatprep.subr.bf16.mxu0 0
    %163 = vmatpush1.bf16.msra.mxu0 0
    %164 = vmatprep.subr.bf16.mxu0 0
    %165 = vmatpush1.bf16.msra.mxu0 0
    %166 = vmatprep.subr.bf16.mxu0 0
    %167 = vmatpush1.bf16.msra.mxu0 0
    %168 = vmatprep.subr.bf16.mxu0 0
    %169 = vmatpush1.bf16.msra.mxu0 0
    %170 = vmatprep.subr.bf16.mxu0 0
    %171 = vmatpush1.bf16.msra.mxu0 0
    %172 = vmatprep.subr.bf16.mxu0 0
    %173 = vmatpush1.bf16.msra.mxu0 0
    %174 = vmatprep.mubr.bf16.mxu0 0
    %175 = vmatmul.mubr.bf16.gmra.mrb[0].mxu0 %v92
    %v176 = vpop.f32.mrb[0].mxu0
    %v177 = vadd.f32 %v86, %v176
    %v178 = vpop.f32.mrb[0].mxu0
    %v179 = vpop.f32.mrb[0].mxu0
    %v180 = vadd.f32 %v86, %v179
    %v181 = vpop.f32.mrb[0].mxu0
    %182 = vdwg.mxu0
    %v183 = vmax.f32 %v177, 0.0
    %v184 = vmax.f32 %v180, 0.0
    %v185 = vpack.c.bf16 %v184, %v183
    %v186 = vld [vmem:[#allocation7] sm:$0xf]
    %v187 = vld [vmem:[#allocation7 + $0x4] sm:$0xf]
    %v188 = vld [vmem:[#allocation7 + $0x8] sm:$0xf]
    %v189 = vld [vmem:[#allocation7 + $0xc] sm:$0xf]
    %v190 = vld [vmem:[#allocation7 + $0x10] sm:$0xf]
    %v191 = vld [vmem:[#allocation7 + $0x14] sm:$0xf]
    %v192 = vld [vmem:[#allocation7 + $0x18] sm:$0xf]
    %v193 = vld [vmem:[#allocation7 + $0x1c] sm:$0xf]
    %v194 = vld [vmem:[#allocation7 + $0x20] sm:$0xf]
    %v195 = vld [vmem:[#allocation7 + $0x24] sm:$0xf]
    %v196 = vld [vmem:[#allocation7 + $0x28] sm:$0xf]
    %v197 = vld [vmem:[#allocation7 + $0x2c] sm:$0xf]
    %v198 = vld [vmem:[#allocation7 + $0x30] sm:$0xf]
    %v199 = vld [vmem:[#allocation7 + $0x34] sm:$0xf]
    %v200 = vld [vmem:[#allocation7 + $0x38] sm:$0xf]
    %v201 = vld [vmem:[#allocation7 + $0x3c] sm:$0xf]
    %v202 = vld [vmem:[%s4] sm:$0x1]
    %v204 = vlaneseq
    %v205 = vshrl.u32 %v204, 7
    %v206 = vsub.s32 0, %v205
    %v207 = vrot.slane %v202, %v206
    %v225 = vunpack.c.l.b16 %v186
    %v226 = vunpack.c.l.b16 %v187
    %v227 = vunpack.c.l.b16 %v188
    %v228 = vunpack.c.l.b16 %v189
    %v229 = vunpack.c.l.b16 %v190
    %v230 = vunpack.c.l.b16 %v191
    %v231 = vunpack.c.l.b16 %v192
    %v232 = vunpack.c.l.b16 %v193
    %v233 = vunpack.c.l.b16 %v194
    %v234 = vunpack.c.l.b16 %v195
    %v235 = vunpack.c.l.b16 %v196
    %v236 = vunpack.c.l.b16 %v197
    %v237 = vunpack.c.l.b16 %v198
    %v238 = vunpack.c.l.b16 %v199
    %v239 = vunpack.c.l.b16 %v200
    %v240 = vunpack.c.l.b16 %v201
    %v241 = vpack.c.b16 %v226, %v225
    %v242 = vpack.c.b16 %v228, %v227
    %v243 = vpack.c.b16 %v230, %v229
    %v244 = vpack.c.b16 %v232, %v231
    %v245 = vpack.c.b16 %v234, %v233
    %v246 = vpack.c.b16 %v236, %v235
    %v247 = vpack.c.b16 %v238, %v237
    %v248 = vpack.c.b16 %v240, %v239
    %257 = vmatprep.subr.bf16.mxu0 0
    %258 = vmatpush1.bf16.msra.mxu0 %v241
    %259 = vmatprep.subr.bf16.mxu0 0
    %260 = vmatpush1.bf16.msra.mxu0 %v242
    %261 = vmatprep.subr.bf16.mxu0 0
    %262 = vmatpush1.bf16.msra.mxu0 %v243
    %263 = vmatprep.subr.bf16.mxu0 0
    %264 = vmatpush1.bf16.msra.mxu0 %v244
    %265 = vmatprep.subr.bf16.mxu0 0
    %266 = vmatpush1.bf16.msra.mxu0 %v245
    %267 = vmatprep.subr.bf16.mxu0 0
    %268 = vmatpush1.bf16.msra.mxu0 %v246
    %269 = vmatprep.subr.bf16.mxu0 0
    %270 = vmatpush1.bf16.msra.mxu0 %v247
    %271 = vmatprep.subr.bf16.mxu0 0
    %272 = vmatpush1.bf16.msra.mxu0 %v248
    %273 = vmatprep.subr.bf16.mxu0 0
    %274 = vmatpush1.bf16.msra.mxu0 0
    %275 = vmatprep.subr.bf16.mxu0 0
    %276 = vmatpush1.bf16.msra.mxu0 0
    %277 = vmatprep.subr.bf16.mxu0 0
    %278 = vmatpush1.bf16.msra.mxu0 0
    %279 = vmatprep.subr.bf16.mxu0 0
    %280 = vmatpush1.bf16.msra.mxu0 0
    %281 = vmatprep.subr.bf16.mxu0 0
    %282 = vmatpush1.bf16.msra.mxu0 0
    %283 = vmatprep.subr.bf16.mxu0 0
    %284 = vmatpush1.bf16.msra.mxu0 0
    %285 = vmatprep.subr.bf16.mxu0 0
    %286 = vmatpush1.bf16.msra.mxu0 0
    %287 = vmatprep.subr.bf16.mxu0 0
    %288 = vmatpush1.bf16.msra.mxu0 0
    %289 = vmatprep.mubr.bf16.mxu0 0
    %290 = vmatmul.mubr.bf16.gmra.mrb[0].mxu0 %v185
    %v291 = vpop.f32.mrb[0].mxu0
    %v292 = vadd.f32 %v207, %v291
    %v293 = vpop.f32.mrb[0].mxu0
    %v294 = vpop.f32.mrb[0].mxu0
    %v295 = vadd.f32 %v207, %v294
    %v296 = vpop.f32.mrb[0].mxu0
    %297 = vdwg.mxu0
    %298 = vst [vmem:[#allocation8] sm:$0xff] %v292
    %299 = vst [vmem:[#allocation8 + $0x8] sm:$0xff] %v295
    // Predicated region
    $region34: #{tpu_custom_call.1} parent=1 // pred_check
      _
    $region35: #{tpu_custom_call.1} parent=1 // pred_check_branch
      %301 = sbr.rel (0) target = $region37
    $region36: #{tpu_custom_call.1} parent=1 // pred_region
      %s303 = ssub.s32 256, 256
      %304 = vsyncadd [#allocation4], %s303
      %s305 = sshll.u32 [#allocation8], 4
      %s306 = int_to_ptr.vmem [resolvable:$true] %s305
      %311 = dma.vmem_to_hbm [thread:$0]  %s306, 256, %s5, [#allocation4], 128, 128, 8
    $region37: #{tpu_custom_call.1} parent=1 // pred_fallthru
      _
    // Predicated region
    $region38: #{tpu_custom_call.1} parent=1 // pred_check
      _
    $region39: #{tpu_custom_call.1} parent=1 // pred_check_branch
      %313 = sbr.rel (0) target = $region41
    $region40: #{tpu_custom_call.1} parent=1 // pred_region
      %314 = dma.done [#allocation4], 256
    $region41: #{tpu_custom_call.1} parent=1 // pred_fallthru
      _
    %315 = vsyncpa [#allocation3], 1
    %316 = vsyncpa [#allocation6], 1
    %317 = vsyncpa [#allocation4], 1

</llo_original>
